<compile_context>
chip_gen: v7x
topology: tpu7x:2x2x1
jax: 0.10.0
libtpu: 0.0.40
codegen_flags: <defaults>
</compile_context>

<pallas_src>
import jax
import jax.numpy as jnp
from jax import lax
from jax.experimental import pallas as pl
from jax.experimental.pallas import tpu as pltpu


def _round_up(x, m):
    return ((x + m - 1) // m) * m


def shrink(dim, shrink_factor):
    # mirrors the PyTorch helper
    if dim > 10:
        return max(10, int(dim * shrink_factor))
    return dim


def embedding_gather_kernel(idx_ref, table_ref, o_ref):
    """One batch tile of an embedding lookup.

    idx_ref:   (TB, 1)  int32  row indices for this batch tile
    table_ref: (Vp, Dp) f32    full (padded) embedding table, VMEM resident
    o_ref:     (TB, Dp) f32    gathered rows
    """
    ids = idx_ref[...]                                    # (TB, 1) int32
    tb = ids.shape[0]
    vp = table_ref.shape[0]
    # Build the one-hot selection matrix on the VPU, then let the MXU do the
    # gather as a single matmul: (TB, Vp) @ (Vp, Dp) -> (TB, Dp).
    onehot = (ids == lax.broadcasted_iota(jnp.int32, (tb, vp), 1)
              ).astype(jnp.float32)
    o_ref[...] = jnp.dot(onehot, table_ref[...],
                         preferred_element_type=jnp.float32)


# Keep the resident table + double-buffered tiles well under the scoped VMEM
# default on every chip generation (v7x has the smallest VMEM: 64 MiB total,
# 32 MiB scoped default).
_MAX_TABLE_VMEM_BYTES = 8 * 1024 * 1024


def embedding_lookup(indices, table, *, tb=512):
    """indices: (B,) int; table: (V, D) float. Returns (B, D) f32 rows."""
    B = int(indices.shape[0])
    V, D = int(table.shape[0]), int(table.shape[1])

    # Lane/sublane friendly padding: embedding dim -> multiple of 128 lanes
    # (lane-dense unmasked stores), vocab -> multiple of 8 sublanes.  Padded
    # rows are zeros and never selected; padded cols are sliced off after.
    Dp = _round_up(D, 128)
    Vp = _round_up(V, 8)

    if Vp * Dp * 4 > _MAX_TABLE_VMEM_BYTES:
        # TODO(synk): huge-vocab path would need a manual DMA row-gather;
        # fall back to XLA's gather so results stay correct.
        return jnp.take(table.astype(jnp.float32),
                        indices.astype(jnp.int32), axis=0)

    table_p = jnp.zeros((Vp, Dp), jnp.float32).at[:V, :D].set(
        table.astype(jnp.float32))

    # Batch tile: biggest useful tile, multiple of 8; pad ragged batches.
    TB = min(tb, _round_up(B, 8))
    Bp = _round_up(B, TB)
    idx_p = jnp.zeros((Bp, 1), jnp.int32).at[:B, 0].set(
        indices.astype(jnp.int32))

    grid = (Bp // TB,)
    flops = 2 * Bp * Vp * Dp                             # one-hot matmul
    bytes_accessed = table_p.size * 4 + idx_p.size * 4 + Bp * Dp * 4

    out = pl.pallas_call(
        embedding_gather_kernel,
        out_shape=jax.ShapeDtypeStruct((Bp, Dp), jnp.float32),
        grid_spec=pltpu.PrefetchScalarGridSpec(
            num_scalar_prefetch=0,
            grid=grid,
            in_specs=[
                pl.BlockSpec((TB, 1), lambda i: (i, 0)),    # index tile
                pl.BlockSpec((Vp, Dp), lambda i: (0, 0)),   # table (resident)
            ],
            out_specs=pl.BlockSpec((TB, Dp), lambda i: (i, 0)),
        ),
        compiler_params=pltpu.CompilerParams(
            dimension_semantics=("parallel",)),
        cost_estimate=pl.CostEstimate(
            flops=flops, transcendentals=0, bytes_accessed=bytes_accessed),
    )(idx_p, table_p)

    return out[:B, :D]


def cats_forward(inputs, tables):
    """Pallas equivalent of Cats.forward.

    inputs: (B, num_cats) integer array
    tables: list of (V_i, D_i) embedding tables
    returns: list of flattened (B * D_i,) float32 arrays (one per category)
    """
    outs = []
    for i, table in enumerate(tables):
        rows = embedding_lookup(inputs[:, i], table)
        outs.append(rows.reshape(-1))
    return outs


if __name__ == "__main__":
    key = jax.random.PRNGKey(0)

    # Small shapes consistent with the module.
    B = 8
    cat_in_dims = [7, 13, 30]        # vocab sizes
    cat_out_dims = [4, 8, 16]        # requested embedding dims
    shrink_factor = 1.0
    out_dims = [shrink(d, shrink_factor) for d in cat_out_dims]

    # Deterministic embedding tables (nn.Embedding default init: N(0, 1)).
    keys = jax.random.split(key, len(cat_in_dims) + 1)
    tables = [
        jax.random.normal(keys[i], (cat_in_dims[i], out_dims[i]),
                          dtype=jnp.float32)
        for i in range(len(cat_in_dims))
    ]

    # Deterministic integer inputs, one column per category.
    idx_keys = jax.random.split(keys[-1], len(cat_in_dims))
    cols = [
        jax.random.randint(idx_keys[i], (B,), 0, cat_in_dims[i],
                           dtype=jnp.int32)
        for i in range(len(cat_in_dims))
    ]
    inputs = jnp.stack(cols, axis=1)                     # (B, num_cats)

    outs = cats_forward(inputs, tables)
    outs = [jax.block_until_ready(o) for o in outs]

    # Reference: plain JAX gather + flatten (matches torch semantics).
    for i, table in enumerate(tables):
        ref = table[inputs[:, i]].reshape(-1)
        assert outs[i].shape == (B * out_dims[i],), \
            f"shape mismatch for category {i}: {outs[i].shape}"
        assert jnp.allclose(outs[i], ref, atol=1e-6, rtol=1e-6), \
            f"mismatch vs reference for category {i}"

    print("KERNEL_OK")
</pallas_src>

<mosaic_0001>
module attributes {stable_mosaic.version = 11 : i64} {
  func.func @embedding_gather_kernel(%arg0: i32, %arg1: memref<8x1xi32, #tpu.memory_space<vmem>>, %arg2: memref<8x128xf32, #tpu.memory_space<vmem>>, %arg3: memref<8x128xf32, #tpu.memory_space<vmem>>) attributes {dimension_semantics = [#tpu.dimension_semantics<parallel>], iteration_bounds = array<i64: 1>, scalar_prefetch = 0 : i64, scratch_operands = 0 : i64, tpu.core_type = #tpu.core_type<tc>, window_params = [{transform_indices = @transform_0, window_bounds = array<i64: 8, 1>}, {pipeline_mode = #tpu.pipeline_mode<synchronous>, transform_indices = @transform_1, window_bounds = array<i64: 8, 128>}, {transform_indices = @transform_2, window_bounds = array<i64: 8, 128>}]} {
    %c0 = arith.constant 0 : index
    %c0_0 = arith.constant 0 : index
    %0 = vector.load %arg1[%c0, %c0_0] : memref<8x1xi32, #tpu.memory_space<vmem>>, vector<8x1xi32>
    %1 = tpu.iota {dimensions = array<i32: 1>} : vector<8x8xi32>
    %2 = vector.broadcast %0 : vector<8x1xi32> to vector<8x8xi32>
    %3 = arith.cmpi eq, %2, %1 : vector<8x8xi32>
    %4 = arith.extui %3 : vector<8x8xi1> to vector<8x8xi32>
    %5 = arith.sitofp %4 : vector<8x8xi32> to vector<8x8xf32>
    %c0_1 = arith.constant 0 : index
    %c0_2 = arith.constant 0 : index
    %6 = vector.load %arg2[%c0_1, %c0_2] : memref<8x128xf32, #tpu.memory_space<vmem>>, vector<8x128xf32>
    %cst = arith.constant dense<0.000000e+00> : vector<8x128xf32>
    %7 = tpu.matmul %5, %6, %cst {dimension_numbers = #tpu.dot_dimension_numbers<[1], [0], [0], [1], [0, 0, 1, 1], [], []>} : vector<8x8xf32>, vector<8x128xf32>, vector<8x128xf32> -> vector<8x128xf32>
    %c0_3 = arith.constant 0 : index
    %c0_4 = arith.constant 0 : index
    %8 = vector.load %arg3[%c0_3, %c0_4] : memref<8x128xf32, #tpu.memory_space<vmem>>, vector<8x128xf32>
    tpu.vector_store %arg3[%c0_3, %c0_4], %7 {strides = array<i32>} : memref<8x128xf32, #tpu.memory_space<vmem>>, vector<8x128xf32>,
    return
  }
  func.func @transform_0(%arg0: i32) -> (i32, i32) {
    %c0_i32 = arith.constant 0 : i32
    %c0_i32_0 = arith.constant 0 : i32
    return %arg0, %c0_i32 : i32, i32
  }
  func.func @transform_1(%arg0: i32) -> (i32, i32) {
    %c0_i32 = arith.constant 0 : i32
    %c0_i32_0 = arith.constant 0 : i32
    %c0_i32_1 = arith.constant 0 : i32
    return %c0_i32, %c0_i32_0 : i32, i32
  }
  func.func @transform_2(%arg0: i32) -> (i32, i32) {
    %c0_i32 = arith.constant 0 : i32
    %c0_i32_0 = arith.constant 0 : i32
    return %arg0, %c0_i32 : i32, i32
  }
}

</mosaic_0001>

<llo_original>
// kernel: tpu_custom_call.1
$region0: #{tpu_custom_call.1}
  #allocation0 [shape = 'u32[]', space=smem, size = 0x4, offset = 0x4, fixed_abs, tag = 'smem constant byte address 0x4 - core index']
  #allocation1 [shape = 'u32[144,128]{1,0:T(1,128)}', space=vmem, size = 0x12000, scoped, tag = 'internal scratch']
  %s0 = inlined_call_operand.vmem [shape: s32[8,1], index: 0, kind: input, shape index: {}]
  %s1 = inlined_call_operand.vmem [shape: f32[8,128], index: 1, kind: input, shape index: {}]
  %s2 = inlined_call_operand.hbm [shape: f32[8,128], index: 2, kind: output, shape index: {}]
  %s3 = sld [smem:[#allocation0]]
  $region18: #{tpu_custom_call.1} parent=0
    _
  %s5 = ssub.s32 1, %s3
  %s6 = scalar_select 0, %s5, %s3
  $region1: #{tpu_custom_call.1} parent=0
    #allocation2 [shape = 'u8[4096]{0}', space=vmem, size = 0x1000, scoped, tag = 'output window, operand 0, single buffered']
    #allocation3 [shape = 's32[1]{0}', space=sflag, size = 0x4, scoped, tag = 'scoped memory for tpu_custom_call.1']
    %7 = vsyncpa [#allocation3], 0
    // Predicated region
    $region2: #{tpu_custom_call.1} parent=1 // pred_check
      _
    $region3: #{tpu_custom_call.1} parent=1 // pred_check_branch
      %9 = sbr.rel (0) target = $region5
    $region4: #{tpu_custom_call.1} parent=1 // pred_region
      _
    $region5: #{tpu_custom_call.1} parent=1 // pred_fallthru
      _
    // Predicated region
    $region6: #{tpu_custom_call.1} parent=1 // pred_check
      _
    $region7: #{tpu_custom_call.1} parent=1 // pred_check_branch
      %11 = sbr.rel (0) target = $region9
    $region8: #{tpu_custom_call.1} parent=1 // pred_region
      _
    $region9: #{tpu_custom_call.1} parent=1 // pred_fallthru
      _
    %v12 = vld [vmem:[%s0] sm:$0xff]
    %v13 = vlaneseq
    %v14 = vand.u32 %v13, 127
    %15 = vset.pattern.permute.xlu0 0
    %16 = vperm.xlu0 %15, %v12
    %v17 = vpop.permute.xlu0 %16
    %vm18 = vcmp.eq.s32.totalorder %v17, %v14
    %v19 = vsel %vm18, 1, 0
    %v20 = vcvt.s32.f32 %v19
    %v21 = vld [vmem:[%s1] sm:$0xff]
    %vm22 = vcmask 64512
    %v24 = vsel %vm22, %v20, 0
    %26 = vmatprep.subr.mxu0 0.0
    %27 = vmatpush1.msra.mxu0 %v21
    %28 = vmatprep.subr.mxu0 0.0
    %29 = vmatpush1.msra.mxu0 0.0
    %30 = vmatprep.subr.mxu0 0.0
    %31 = vmatpush1.msra.mxu0 0.0
    %32 = vmatprep.subr.mxu0 0.0
    %33 = vmatpush1.msra.mxu0 0.0
    %34 = vmatprep.subr.mxu0 0.0
    %35 = vmatpush1.msra.mxu0 0.0
    %36 = vmatprep.subr.mxu0 0.0
    %37 = vmatpush1.msra.mxu0 0.0
    %38 = vmatprep.subr.mxu0 0.0
    %39 = vmatpush1.msra.mxu0 0.0
    %40 = vmatprep.subr.mxu0 0.0
    %41 = vmatpush1.msra.mxu0 0.0
    %42 = vmatprep.subr.mxu0 0.0
    %43 = vmatpush1.msra.mxu0 0.0
    %44 = vmatprep.subr.mxu0 0.0
    %45 = vmatpush1.msra.mxu0 0.0
    %46 = vmatprep.subr.mxu0 0.0
    %47 = vmatpush1.msra.mxu0 0.0
    %48 = vmatprep.subr.mxu0 0.0
    %49 = vmatpush1.msra.mxu0 0.0
    %50 = vmatprep.subr.mxu0 0.0
    %51 = vmatpush1.msra.mxu0 0.0
    %52 = vmatprep.subr.mxu0 0.0
    %53 = vmatpush1.msra.mxu0 0.0
    %54 = vmatprep.subr.mxu0 0.0
    %55 = vmatpush1.msra.mxu0 0.0
    %56 = vmatprep.subr.mxu0 0.0
    %57 = vmatpush1.msra.mxu0 0.0
    %58 = vmatprep.subr.mxu0 0.0
    %59 = vmatpush1.msra.mxu0 0.0
    %60 = vmatprep.subr.mxu0 0.0
    %61 = vmatpush1.msra.mxu0 0.0
    %62 = vmatprep.subr.mxu0 0.0
    %63 = vmatpush1.msra.mxu0 0.0
    %64 = vmatprep.subr.mxu0 0.0
    %65 = vmatpush1.msra.mxu0 0.0
    %66 = vmatprep.subr.mxu0 0.0
    %67 = vmatpush1.msra.mxu0 0.0
    %68 = vmatprep.subr.mxu0 0.0
    %69 = vmatpush1.msra.mxu0 0.0
    %70 = vmatprep.subr.mxu0 0.0
    %71 = vmatpush1.msra.mxu0 0.0
    %72 = vmatprep.subr.mxu0 0.0
    %73 = vmatpush1.msra.mxu0 0.0
    %74 = vmatprep.subr.mxu0 0.0
    %75 = vmatpush1.msra.mxu0 0.0
    %76 = vmatprep.subr.mxu0 0.0
    %77 = vmatpush1.msra.mxu0 0.0
    %78 = vmatprep.subr.mxu0 0.0
    %79 = vmatpush1.msra.mxu0 0.0
    %80 = vmatprep.subr.mxu0 0.0
    %81 = vmatpush1.msra.mxu0 0.0
    %82 = vmatprep.subr.mxu0 0.0
    %83 = vmatpush1.msra.mxu0 0.0
    %84 = vmatprep.subr.mxu0 0.0
    %85 = vmatpush1.msra.mxu0 0.0
    %86 = vmatprep.subr.mxu0 0.0
    %87 = vmatpush1.msra.mxu0 0.0
    %88 = vmatprep.subr.mxu0 0.0
    %89 = vmatpush1.msra.mxu0 0.0
    %90 = vmatprep.mubr.f32.mxu0 0.0
    %91 = vmatmul.mubr.f32.gmra.mrb[0].mxu0 %v24
    %v92 = vpop.f32.mrb[0].mxu0
    %v93 = vadd.f32 0.0, %v92
    %v94 = vpop.f32.mrb[0].mxu0
    %95 = vdwg.mxu0
    %96 = vst [vmem:[#allocation2] sm:$0xff] %v93
    // Predicated region
    $region10: #{tpu_custom_call.1} parent=1 // pred_check
      _
    $region11: #{tpu_custom_call.1} parent=1 // pred_check_branch
      %98 = sbr.rel (0) target = $region13
    $region12: #{tpu_custom_call.1} parent=1 // pred_region
      %s100 = ssub.s32 128, 128
      %101 = vsyncadd [#allocation3], %s100
      %s103 = sshll.u32 [#allocation2], 4
      %s104 = int_to_ptr.vmem [resolvable:$true] %s103
      %106 = dma.vmem_to_hbm [thread:$0]  %s104, 128, %s2, [#allocation3]
    $region13: #{tpu_custom_call.1} parent=1 // pred_fallthru
      _
    // Predicated region
    $region14: #{tpu_custom_call.1} parent=1 // pred_check
      _
    $region15: #{tpu_custom_call.1} parent=1 // pred_check_branch
      %108 = sbr.rel (0) target = $region17
    $region16: #{tpu_custom_call.1} parent=1 // pred_region
      %109 = dma.done [#allocation3], 128
    $region17: #{tpu_custom_call.1} parent=1 // pred_fallthru
      _
    %110 = vsyncpa [#allocation3], 1

</llo_original>
